<compile_context>
chip_gen: v7x
topology: tpu7x:2x2x1
jax: 0.10.0
libtpu: 0.0.40
codegen_flags: <defaults>
</compile_context>

<pallas_src>
import functools

import jax
import jax.numpy as jnp
from jax.experimental import pallas as pl
from jax.experimental.pallas import tpu as pltpu


def _masked_conv1d_kernel(flags_ref, x_ref, w_ref, b_ref, m_ref, o_ref, *,
                          order, t_o, dyn_window):
    """One (batch b, time-tile j) grid step.  All blocks are auto-pipelined.

    flags_ref : SMEM (B*num_tiles,) int32  -- 1 iff tile has any valid position
    x_ref     : VMEM (1, n_phase, C_in, L) -- padded (polyphase) input row / window
    w_ref     : VMEM (K, C_out, C_in)      -- conv taps in (phase, shift) order
    b_ref     : VMEM (C_out, 1) f32        -- bias
    m_ref     : VMEM (1, 1, t_o) f32       -- strided mask tile
    o_ref     : VMEM (1, C_out, t_o)       -- output tile
    """
    b = pl.program_id(0)
    j = pl.program_id(1)
    num_tiles = pl.num_programs(1)
    valid = flags_ref[b * num_tiles + j] != 0
    n_phase = x_ref.shape[1]

    @pl.when(valid)
    def _():
        acc = None
        for r in range(n_phase):
            # One lane-aligned window load per phase; the per-tap shifts are
            # small STATIC slices of the loaded value -- no explicit operand
            # buffer, hence no vld/vst-heavy copy loop (v5e store-slot fix).
            if dyn_window:
                base = pl.multiple_of(j * t_o, 128)       # t_o % 128 == 0 here
                xw = x_ref[0, r, :, pl.ds(base, t_o + 128)]
            else:
                xw = x_ref[0, r]                          # full (static) window
            for idx, (rr, a) in enumerate(order):
                if rr != r:
                    continue
                part = jnp.dot(w_ref[idx], xw[:, a:a + t_o],
                               preferred_element_type=jnp.float32)
                acc = part if acc is None else acc + part
        acc = acc + b_ref[...]               # bias  (C_out, 1)  f32
        acc = acc * m_ref[0]                 # mask  (1, t_o)    f32
        o_ref[0] = acc.astype(o_ref.dtype)

    @pl.when(jnp.logical_not(valid))
    def _():
        # Fully-masked tile: skip the matmul entirely; output is exactly zero.
        o_ref[...] = jnp.zeros_like(o_ref)


def _vmem_budget_bytes():
    cap = 64 * 2 ** 20                        # conservative default (v7x-sized)
    try:
        cap = int(getattr(pltpu.get_tpu_info(), "vmem_capacity_bytes", cap))
    except Exception:
        pass
    return (3 * cap) // 4                     # ~48 MiB on v7x, ~96 MiB on v5e/v6e


def _pick_tile(t_out, t_tile):
    """Largest 128-multiple tile <= t_tile dividing t_out (avoids output tail
    padding + the final slice copy); otherwise fall back to t_tile + padding."""
    if t_out <= t_tile:
        return t_out, 1
    assert t_tile % 128 == 0
    for cand in range(t_tile, 127, -128):
        if t_out % cand == 0:
            return cand, t_out // cand
    return t_tile, pl.cdiv(t_out, t_tile)


def masked_conv1d(x, mask, weight, bias, *, stride=1, compute_dtype=None,
                  t_tile=None, force_windowed=False):
    """x: (B, C_in, T), mask: (B, 1, T) bool, weight: (C_out, C_in, K),
    bias: (C_out,).  Returns (out_conv (B, C_out, T//stride), out_mask bool).
    Supports groups=1, dilation=1, padding=K//2 (what MaskedConv1D asserts)."""
    B, C_in, T = x.shape
    C_out, c_in_w, K = weight.shape
    assert c_in_w == C_in and K % 2 == 1 and T % stride == 0
    pad = K // 2
    out_dtype = x.dtype
    if compute_dtype is None:
        compute_dtype = x.dtype

    vmem_budget = _vmem_budget_bytes()
    if t_tile is None:
        # Bigger tiles amortize per-step overhead on the 128-MiB-VMEM chips.
        t_tile = 1024 if vmem_budget >= 80 * 2 ** 20 else 512

    # ---- time tiling of the (strided) output ---------------------------------
    t_out = T // stride
    t_o, num_tiles = _pick_tile(t_out, t_tile)
    t_out_pad = num_tiles * t_o

    a_max = (K + stride - 1) // stride        # taps per phase (max)
    # taps regrouped by (phase r, intra-phase shift a); total taps == K
    order = tuple((r, a) for r in range(stride)
                  for a in range((K - r + stride - 1) // stride))
    n_taps = len(order)
    assert n_taps == K

    cbytes = jnp.dtype(compute_dtype).itemsize
    obytes = jnp.dtype(out_dtype).itemsize

    # ---- decide x residency: whole padded row resident in VMEM (normal case) --
    halo = a_max if num_tiles == 1 else 128   # 128 keeps dynamic windows lane-aligned
    lp_res = t_out_pad + halo
    resident_est = (2 * stride * C_in * lp_res * cbytes    # x row, double-buffered
                    + 2 * n_taps * C_out * C_in * cbytes   # weight taps
                    + 2 * C_out * t_o * obytes             # output blocks
                    + 2 * t_o * 4 + C_out * 4              # mask + bias
                    + C_out * t_o * 4                      # f32 accumulator
                    + 2 * C_in * (t_o + 128) * cbytes      # per-phase window staging
                    + (2 << 20))                           # headroom
    row_resident = ((not force_windowed) and (a_max - 1) <= 128
                    and resident_est <= vmem_budget)

    lp = lp_res if row_resident else t_out_pad + a_max
    t_w = t_o + a_max - 1

    # ---- padded (and, for stride > 1, polyphase) view of x --------------------
    right = lp * stride - T - pad
    x_big = jnp.pad(x.astype(compute_dtype), ((0, 0), (0, 0), (pad, right)))
    if stride == 1:
        x_ph = x_big[:, None]                               # (B, 1, C_in, lp): no copy
    else:
        # TODO(synk): per-phase strided DMA (pl.ds(..., stride=stride)) straight
        # from the original layout would avoid materializing this polyphase copy.
        x_ph = x_big.reshape(B, C_in, lp, stride).transpose(0, 3, 1, 2)

    if row_resident:
        x_in = x_ph                                          # (B, stride, C_in, lp)
        x_spec = pl.BlockSpec((1, stride, C_in, lp),
                              lambda b, j, f: (b, 0, 0, 0))  # row resident across j
    else:
        # Rare huge-row fallback: materialize per-tile halo'd windows so each
        # grid step's x block is small (still fully auto-pipelined).
        win = jnp.arange(num_tiles)[:, None] * t_o + jnp.arange(t_w)[None, :]
        x_win = jnp.take(x_ph, win.reshape(-1), axis=3)
        x_win = x_win.reshape(B, stride, C_in, num_tiles, t_w)
        x_in = x_win.transpose(0, 3, 1, 2, 4).reshape(B * num_tiles, stride, C_in, t_w)
        x_spec = pl.BlockSpec((1, stride, C_in, t_w),
                              lambda b, j, f, n=num_tiles: (b * n + j, 0, 0, 0))

    # ---- weights: one (C_out, C_in) slice per tap, in (phase, shift) order ----
    tap_idx = jnp.asarray([a * stride + r for (r, a) in order], dtype=jnp.int32)
    w_taps = (jnp.take(weight, tap_idx, axis=2)              # (C_out, C_in, K)
              .transpose(2, 0, 1)                            # (K, C_out, C_in)
              .astype(compute_dtype))
    b_col = bias.reshape(C_out, 1).astype(jnp.float32)

    # ---- mask: nearest resample == stride subsample (T % stride == 0) ---------
    mask_s = mask[:, :, ::stride]
    mask_pad = jnp.pad(mask_s, ((0, 0), (0, 0), (0, t_out_pad - t_out)))
    mask_f = mask_pad.astype(jnp.float32)                    # f32 epilogue (v5e-safe)

    # ---- per-tile "any valid" flags, scalar-prefetched into SMEM --------------
    flags = jnp.any(mask_pad.reshape(B, num_tiles, t_o), axis=-1)
    flags = flags.reshape(B * num_tiles).astype(jnp.int32)

    kernel = functools.partial(_masked_conv1d_kernel, order=order, t_o=t_o,
                               dyn_window=(row_resident and num_tiles > 1))

    out_pad = pl.pallas_call(
        kernel,
        out_shape=jax.ShapeDtypeStruct((B, C_out, t_out_pad), out_dtype),
        grid_spec=pltpu.PrefetchScalarGridSpec(
            num_scalar_prefetch=1,
            grid=(B, num_tiles),
            in_specs=[
                x_spec,
                pl.BlockSpec((n_taps, C_out, C_in), lambda b, j, f: (0, 0, 0)),
                pl.BlockSpec((C_out, 1), lambda b, j, f: (0, 0)),
                pl.BlockSpec((1, 1, t_o), lambda b, j, f: (b, 0, j)),
            ],
            out_specs=pl.BlockSpec((1, C_out, t_o), lambda b, j, f: (b, 0, j)),
        ),
        compiler_params=pltpu.CompilerParams(
            dimension_semantics=("parallel", "parallel"),
            vmem_limit_bytes=int(vmem_budget),
        ),
    )(flags, x_in, w_taps, b_col, mask_f)

    out_conv = out_pad[:, :, :t_out]
    return out_conv, mask_s.astype(jnp.bool_)


def _reference(x, mask, weight, bias, stride):
    # Pure-JAX reference (XLA conv) for correctness checking.
    pad = weight.shape[-1] // 2
    out = jax.lax.conv_general_dilated(
        x, weight, window_strides=(stride,), padding=[(pad, pad)],
        dimension_numbers=("NCH", "OIH", "NCH"))
    out = out + bias.reshape(1, -1, 1)
    m = mask[:, :, ::stride]
    return out * m.astype(x.dtype), m


if __name__ == "__main__":
    key = jax.random.PRNGKey(0)

    def run_case(name, B, C_in, C_out, T, K, stride, compute_dtype, t_tile,
                 atol, rtol, case_key, mask_lens=None, force_windowed=False):
        k1, k2, k3, k4 = jax.random.split(case_key, 4)
        x = jax.random.normal(k1, (B, C_in, T), dtype=jnp.float32)
        bound = 1.0 / (C_in * K) ** 0.5        # PyTorch Conv1d default init scale
        w = jax.random.uniform(k2, (C_out, C_in, K), jnp.float32, -bound, bound)
        bias = jax.random.uniform(k3, (C_out,), jnp.float32, -0.1, 0.1)
        if mask_lens is None:
            mask = jax.random.uniform(k4, (B, 1, T)) > 0.25
        else:
            t_idx = jnp.arange(T)[None, None, :]
            mask = t_idx < jnp.asarray(mask_lens, jnp.int32)[:, None, None]

        out, om = masked_conv1d(x, mask, w, bias, stride=stride,
                                compute_dtype=compute_dtype, t_tile=t_tile,
                                force_windowed=force_windowed)
        out = jax.block_until_ready(out)
        om = jax.block_until_ready(om)

        ref, rm = _reference(x, mask, w, bias, stride)
        assert out.shape == ref.shape and om.shape == rm.shape, name
        max_err = float(jnp.max(jnp.abs(out - ref)))
        assert jnp.allclose(out, ref, atol=atol, rtol=rtol), (name, max_err)
        assert bool(jnp.all(om == rm)), name

    keys = jax.random.split(key, 5)
    # small, stride 1, f32 (single time tile, row-resident, auto-pipelined)
    run_case("s1_f32", 2, 4, 6, 16, 3, 1, jnp.float32, 512, 5e-4, 5e-4, keys[0])
    # small, stride 2 -> direct strided compute via the polyphase path
    run_case("s2_f32", 2, 4, 4, 16, 3, 2, jnp.float32, 512, 5e-4, 5e-4, keys[1])
    # multi time tile (row-resident, dynamic 128-aligned windows) + masked tails
    run_case("tiles_f32", 2, 8, 8, 512, 5, 1, jnp.float32, 128, 5e-4, 5e-4,
             keys[2], mask_lens=(300, 220))
    # huge-row fallback path (materialized per-tile halo windows), stride 2
    run_case("win_f32", 2, 8, 8, 512, 3, 2, jnp.float32, 128, 5e-4, 5e-4,
             keys[3], force_windowed=True)
    # bf16 operands, f32 accumulation
    run_case("s1_bf16", 2, 4, 4, 16, 3, 1, jnp.bfloat16, 512, 1e-1, 1e-1, keys[4])

    print("KERNEL_OK")
</pallas_src>

<mosaic_0001>
module attributes {stable_mosaic.version = 11 : i64} {
  func.func @_masked_conv1d_kernel(%arg0: i32, %arg1: i32, %arg2: memref<2xi32, #tpu.memory_space<smem>>, %arg3: memref<1x1x4x19xf32, #tpu.memory_space<vmem>>, %arg4: memref<3x6x4xf32, #tpu.memory_space<vmem>>, %arg5: memref<6x1xf32, #tpu.memory_space<vmem>>, %arg6: memref<1x1x16xf32, #tpu.memory_space<vmem>>, %arg7: memref<1x6x16xf32, #tpu.memory_space<vmem>>) attributes {dimension_semantics = [#tpu.dimension_semantics<parallel>, #tpu.dimension_semantics<parallel>], iteration_bounds = array<i64: 2, 1>, scalar_prefetch = 1 : i64, scratch_operands = 0 : i64, tpu.core_type = #tpu.core_type<tc>, window_params = [{transform_indices = @transform_0, window_bounds = array<i64: 1, 1, 4, 19>}, {pipeline_mode = #tpu.pipeline_mode<synchronous>, transform_indices = @transform_1, window_bounds = array<i64: 3, 6, 4>}, {pipeline_mode = #tpu.pipeline_mode<synchronous>, transform_indices = @transform_2, window_bounds = array<i64: 6, 1>}, {transform_indices = @transform_3, window_bounds = array<i64: 1, 1, 16>}, {transform_indices = @transform_4, window_bounds = array<i64: 1, 6, 16>}]} {
    %c1_i32 = arith.constant 1 : i32
    %0 = arith.muli %arg0, %c1_i32 : i32
    %1 = arith.addi %0, %arg1 : i32
    %2 = arith.index_cast %1 : i32 to index
    %3 = memref.load %arg2[%2] : memref<2xi32, #tpu.memory_space<smem>>
    %c0_i32 = arith.constant 0 : i32
    %4 = arith.cmpi ne, %3, %c0_i32 : i32
    %5 = arith.extui %4 : i1 to i32
    %c0_i32_0 = arith.constant 0 : i32
    %6 = arith.cmpi ne, %5, %c0_i32_0 : i32
    scf.if %6 {
      %c0 = arith.constant 0 : index
      %c0_2 = arith.constant 0 : index
      %c0_3 = arith.constant 0 : index
      %c0_4 = arith.constant 0 : index
      %10 = vector.load %arg3[%c0, %c0_2, %c0_3, %c0_4] : memref<1x1x4x19xf32, #tpu.memory_space<vmem>>, vector<1x1x4x19xf32>
      %11 = vector.shape_cast %10 : vector<1x1x4x19xf32> to vector<4x19xf32>
      %c0_5 = arith.constant 0 : index
      %c0_6 = arith.constant 0 : index
      %c0_7 = arith.constant 0 : index
      %12 = vector.load %arg4[%c0_5, %c0_6, %c0_7] : memref<3x6x4xf32, #tpu.memory_space<vmem>>, vector<1x6x4xf32>
      %13 = vector.shape_cast %12 : vector<1x6x4xf32> to vector<6x4xf32>
      %14 = vector.extract_strided_slice %11 {offsets = [0, 0], sizes = [4, 16], strides = [1, 1]} : vector<4x19xf32> to vector<4x16xf32>
      %cst = arith.constant dense<0.000000e+00> : vector<6x16xf32>
      %15 = tpu.matmul %13, %14, %cst {dimension_numbers = #tpu.dot_dimension_numbers<[1], [0], [0], [1], [0, 0, 1, 1], [], []>} : vector<6x4xf32>, vector<4x16xf32>, vector<6x16xf32> -> vector<6x16xf32>
      %c1 = arith.constant 1 : index
      %c0_8 = arith.constant 0 : index
      %c0_9 = arith.constant 0 : index
      %16 = vector.load %arg4[%c1, %c0_8, %c0_9] : memref<3x6x4xf32, #tpu.memory_space<vmem>>, vector<1x6x4xf32>
      %17 = vector.shape_cast %16 : vector<1x6x4xf32> to vector<6x4xf32>
      %18 = vector.extract_strided_slice %11 {offsets = [0, 1], sizes = [4, 16], strides = [1, 1]} : vector<4x19xf32> to vector<4x16xf32>
      %cst_10 = arith.constant dense<0.000000e+00> : vector<6x16xf32>
      %19 = tpu.matmul %17, %18, %cst_10 {dimension_numbers = #tpu.dot_dimension_numbers<[1], [0], [0], [1], [0, 0, 1, 1], [], []>} : vector<6x4xf32>, vector<4x16xf32>, vector<6x16xf32> -> vector<6x16xf32>
      %20 = arith.addf %15, %19 : vector<6x16xf32>
      %c2 = arith.constant 2 : index
      %c0_11 = arith.constant 0 : index
      %c0_12 = arith.constant 0 : index
      %21 = vector.load %arg4[%c2, %c0_11, %c0_12] : memref<3x6x4xf32, #tpu.memory_space<vmem>>, vector<1x6x4xf32>
      %22 = vector.shape_cast %21 : vector<1x6x4xf32> to vector<6x4xf32>
      %23 = vector.extract_strided_slice %11 {offsets = [0, 2], sizes = [4, 16], strides = [1, 1]} : vector<4x19xf32> to vector<4x16xf32>
      %cst_13 = arith.constant dense<0.000000e+00> : vector<6x16xf32>
      %24 = tpu.matmul %22, %23, %cst_13 {dimension_numbers = #tpu.dot_dimension_numbers<[1], [0], [0], [1], [0, 0, 1, 1], [], []>} : vector<6x4xf32>, vector<4x16xf32>, vector<6x16xf32> -> vector<6x16xf32>
      %25 = arith.addf %20, %24 : vector<6x16xf32>
      %c0_14 = arith.constant 0 : index
      %c0_15 = arith.constant 0 : index
      %26 = vector.load %arg5[%c0_14, %c0_15] : memref<6x1xf32, #tpu.memory_space<vmem>>, vector<6x1xf32>
      %27 = vector.broadcast %26 : vector<6x1xf32> to vector<6x16xf32>
      %28 = arith.addf %25, %27 : vector<6x16xf32>
      %c0_16 = arith.constant 0 : index
      %c0_17 = arith.constant 0 : index
      %c0_18 = arith.constant 0 : index
      %29 = vector.load %arg6[%c0_16, %c0_17, %c0_18] : memref<1x1x16xf32, #tpu.memory_space<vmem>>, vector<1x1x16xf32>
      %30 = vector.shape_cast %29 : vector<1x1x16xf32> to vector<1x16xf32>
      %31 = vector.broadcast %30 : vector<1x16xf32> to vector<6x16xf32>
      %32 = arith.mulf %28, %31 : vector<6x16xf32>
      %c0_19 = arith.constant 0 : index
      %c0_20 = arith.constant 0 : index
      %c0_21 = arith.constant 0 : index
      %33 = vector.load %arg7[%c0_19, %c0_20, %c0_21] : memref<1x6x16xf32, #tpu.memory_space<vmem>>, vector<1x6x16xf32>
      %34 = vector.shape_cast %33 : vector<1x6x16xf32> to vector<6x16xf32>
      %35 = vector.shape_cast %32 : vector<6x16xf32> to vector<1x6x16xf32>
      tpu.vector_store %arg7[%c0_19, %c0_20, %c0_21], %35 {strides = array<i32>} : memref<1x6x16xf32, #tpu.memory_space<vmem>>, vector<1x6x16xf32>,
    } else {
    }
    %true = arith.constant true
    %7 = arith.xori %4, %true : i1
    %8 = arith.extui %7 : i1 to i32
    %c0_i32_1 = arith.constant 0 : i32
    %9 = arith.cmpi ne, %8, %c0_i32_1 : i32
    scf.if %9 {
      %cst = arith.constant 0.000000e+00 : f32
      %10 = vector.broadcast %cst : f32 to vector<1x6x16xf32>
      %c0 = arith.constant 0 : index
      %c0_2 = arith.constant 0 : index
      %c0_3 = arith.constant 0 : index
      %11 = vector.load %arg7[%c0, %c0_2, %c0_3] : memref<1x6x16xf32, #tpu.memory_space<vmem>>, vector<1x6x16xf32>
      tpu.vector_store %arg7[%c0, %c0_2, %c0_3], %10 {strides = array<i32>} : memref<1x6x16xf32, #tpu.memory_space<vmem>>, vector<1x6x16xf32>,
    } else {
    }
    return
  }
  func.func @transform_0(%arg0: i32, %arg1: i32, %arg2: memref<2xi32, #tpu.memory_space<smem>>) -> (i32, i32, i32, i32) {
    %c0_i32 = arith.constant 0 : i32
    %c0_i32_0 = arith.constant 0 : i32
    %c0_i32_1 = arith.constant 0 : i32
    %c0_i32_2 = arith.constant 0 : i32
    return %arg0, %c0_i32, %c0_i32_0, %c0_i32_1 : i32, i32, i32, i32
  }
  func.func @transform_1(%arg0: i32, %arg1: i32, %arg2: memref<2xi32, #tpu.memory_space<smem>>) -> (i32, i32, i32) {
    %c0_i32 = arith.constant 0 : i32
    %c0_i32_0 = arith.constant 0 : i32
    %c0_i32_1 = arith.constant 0 : i32
    %c0_i32_2 = arith.constant 0 : i32
    return %c0_i32, %c0_i32_0, %c0_i32_1 : i32, i32, i32
  }
  func.func @transform_2(%arg0: i32, %arg1: i32, %arg2: memref<2xi32, #tpu.memory_space<smem>>) -> (i32, i32) {
    %c0_i32 = arith.constant 0 : i32
    %c0_i32_0 = arith.constant 0 : i32
    %c0_i32_1 = arith.constant 0 : i32
    return %c0_i32, %c0_i32_0 : i32, i32
  }
  func.func @transform_3(%arg0: i32, %arg1: i32, %arg2: memref<2xi32, #tpu.memory_space<smem>>) -> (i32, i32, i32) {
    %c0_i32 = arith.constant 0 : i32
    %c0_i32_0 = arith.constant 0 : i32
    return %arg0, %c0_i32, %arg1 : i32, i32, i32
  }
  func.func @transform_4(%arg0: i32, %arg1: i32, %arg2: memref<2xi32, #tpu.memory_space<smem>>) -> (i32, i32, i32) {
    %c0_i32 = arith.constant 0 : i32
    %c0_i32_0 = arith.constant 0 : i32
    return %arg0, %c0_i32, %arg1 : i32, i32, i32
  }
}

</mosaic_0001>

<llo_original>
// kernel: tpu_custom_call.1
$region0: #{tpu_custom_call.1}
  #allocation0 [shape = 'u32[]', space=smem, size = 0x4, offset = 0x4, fixed_abs, tag = 'smem constant byte address 0x4 - core index']
  #allocation1 [shape = 'u32[144,128]{1,0:T(1,128)}', space=vmem, size = 0x12000, scoped, tag = 'internal scratch']
  #allocation2 [shape = 's32[1]{0}', space=sflag, size = 0x4, scoped, tag = 'scoped memory for tpu_custom_call.1']
  #allocation3 [shape = 'u8[512]{0}', space=smem, size = 0x200, scoped, tag = 'prefetched SMEM operand 0']
  %s0 = inlined_call_operand.vmem [shape: s32[2], index: 0, kind: input, shape index: {}]
  %s1 = inlined_call_operand.vmem [shape: f32[2,1,4,19], index: 1, kind: input, shape index: {}]
  %s2 = inlined_call_operand.vmem [shape: f32[3,6,4], index: 2, kind: input, shape index: {}]
  %s3 = inlined_call_operand.vmem [shape: f32[6,1], index: 3, kind: input, shape index: {}]
  %s4 = inlined_call_operand.vmem [shape: f32[2,1,16], index: 4, kind: input, shape index: {}]
  %s5 = inlined_call_operand.vmem [shape: f32[2,6,16], index: 5, kind: output, shape index: {}]
  %s6 = sld [smem:[#allocation0]]
  $region57: #{tpu_custom_call.1} parent=0
    _
  %s8 = ssub.s32 1, %s6
  %s9 = scalar_select 0, %s8, %s6
  %s10 = sshll.u32 %s0, 4
  %s11 = int_to_ptr.vmem [resolvable:$true] %s10
  %13 = dma.vmem_to_smem %s11, 16, [#allocation3], [#allocation2]
  %14 = dma.done [#allocation2], 16
  %15 = sfence
  loop: start=0, step=1, limit=4
  $region2: #{tpu_custom_call.1} parent=0 // loop_pre_header
    _
  $region3: #{tpu_custom_call.1} parent=0 // loop_header
    %s17 = sphi 0, %s21
    %p18 = scmp.ge.s32.totalorder %s17, 4
    %s24 = sphi 0, %s36
    %s25 = sphi 0, %s32
    %s26 = sphi 0, %s24
    %s27 = sphi 0, %s25
    %s28 = sphi 0, %s26
    %s29 = sphi 0, %s27
    %s39 = sphi 0, %s41
    %s42 = sphi 0, %s39
    %s43 = sphi 0, %s42
    %s59 = sphi 0, %s43
    %s63 = sphi 0, %s63
    %s65 = sphi 0, %s63
    %s66 = sphi 0, %s65
    %s80 = sphi 0, %s66
    %s84 = sphi 0, %s84
    %s86 = sphi 0, %s84
    %s87 = sphi 0, %s86
    %s101 = sphi 0, %s87
    %s109 = sphi 0, %s111
    %s112 = sphi 0, %s109
    %s113 = sphi 0, %s112
    %s129 = sphi 0, %s113
    %s137 = sphi 0, %s139
    %s140 = sphi 0, %s137
    %s141 = sphi 0, %s140
    %s157 = sphi 0, %s141
  $region4: #{tpu_custom_call.1} parent=0 // loop_header_branch
    %20 = sbr.rel (%p18) target = $region8
  $region5: #{tpu_custom_call.1} parent=0 // loop_body
    %s22 = ssub.s32 %s17, 1
    %s23 = ssub.s32 %s17, 2
    %s30 = sadd.s32 1, %s25
    %p31 = scmp.ge.s32.totalorder %s30, 1
    %s32 = scalar_select %p31, 0, %s30
    %s33 = sadd.s32 1, %s24
    %s34 = scalar_select %p31, %s33, %s24
    %p35 = scmp.ge.s32.totalorder %s34, 2
    %s36 = scalar_select %p35, 0, %s34
    %s37 = ssub.s32 %s24, %s36
    %p38 = scmp.eq.s32.totalorder %s37, 0
    %s40 = sadd.s32 %s39, 1
    %s41 = scalar_select %p38, %s39, %s40
    %p44 = pneg %p38
    %p45 = scmp.eq.s32.totalorder %s17, 1
    %p46 = por %p44, %p45
    %p47 = scmp.ne.s32.totalorder %s39, %s42
    %p48 = scmp.eq.s32.totalorder %s17, 0
    %p49 = por %p47, %p48
    %p50 = scmp.ne.s32.totalorder %s39, %s42
    %p51 = scmp.eq.s32.totalorder %s22, 1
    %p52 = por %p50, %p51
    %p53 = scmp.ne.s32.totalorder %s42, %s43
    %p54 = scmp.eq.s32.totalorder %s22, 0
    %p55 = por %p53, %p54
    %p56 = scmp.ne.s32.totalorder %s42, %s43
    %p57 = scmp.eq.s32.totalorder %s23, 1
    %p58 = por %p56, %p57
    %p60 = scmp.ne.s32.totalorder %s43, %s59
    %p61 = scmp.eq.s32.totalorder %s23, 0
    %p62 = por %p60, %p61
    %s64 = sadd.s32 %s63, 1
    %p67 = scmp.eq.s32.totalorder %s17, 1
    %p68 = scmp.ne.s32.totalorder %s63, %s65
    %p69 = scmp.eq.s32.totalorder %s17, 0
    %p70 = por %p68, %p69
    %p71 = scmp.ne.s32.totalorder %s63, %s65
    %p72 = scmp.eq.s32.totalorder %s22, 1
    %p73 = por %p71, %p72
    %p74 = scmp.ne.s32.totalorder %s65, %s66
    %p75 = scmp.eq.s32.totalorder %s22, 0
    %p76 = por %p74, %p75
    %p77 = scmp.ne.s32.totalorder %s65, %s66
    %p78 = scmp.eq.s32.totalorder %s23, 1
    %p79 = por %p77, %p78
    %p81 = scmp.ne.s32.totalorder %s66, %s80
    %p82 = scmp.eq.s32.totalorder %s23, 0
    %p83 = por %p81, %p82
    %s85 = sadd.s32 %s84, 1
    %p88 = scmp.eq.s32.totalorder %s17, 1
    %p89 = scmp.ne.s32.totalorder %s84, %s86
    %p90 = scmp.eq.s32.totalorder %s17, 0
    %p91 = por %p89, %p90
    %p92 = scmp.ne.s32.totalorder %s84, %s86
    %p93 = scmp.eq.s32.totalorder %s22, 1
    %p94 = por %p92, %p93
    %p95 = scmp.ne.s32.totalorder %s86, %s87
    %p96 = scmp.eq.s32.totalorder %s22, 0
    %p97 = por %p95, %p96
    %p98 = scmp.ne.s32.totalorder %s86, %s87
    %p99 = scmp.eq.s32.totalorder %s23, 1
    %p100 = por %p98, %p99
    %p102 = scmp.ne.s32.totalorder %s87, %s101
    %p103 = scmp.eq.s32.totalorder %s23, 0
    %p104 = por %p102, %p103
    %s105 = ssub.s32 %s24, %s36
    %s106 = ssub.s32 %s25, %s32
    %s107 = sor.u32 %s105, %s106
    %p108 = scmp.eq.s32.totalorder %s107, 0
    %s110 = sadd.s32 %s109, 1
    %s111 = scalar_select %p108, %s109, %s110
    %p114 = pneg %p108
    %p115 = scmp.eq.s32.totalorder %s17, 1
    %p116 = por %p114, %p115
    %p117 = scmp.ne.s32.totalorder %s109, %s112
    %p118 = scmp.eq.s32.totalorder %s17, 0
    %p119 = por %p117, %p118
    %p120 = scmp.ne.s32.totalorder %s109, %s112
    %p121 = scmp.eq.s32.totalorder %s22, 1
    %p122 = por %p120, %p121
    %p123 = scmp.ne.s32.totalorder %s112, %s113
    %p124 = scmp.eq.s32.totalorder %s22, 0
    %p125 = por %p123, %p124
    %p126 = scmp.ne.s32.totalorder %s112, %s113
    %p127 = scmp.eq.s32.totalorder %s23, 1
    %p128 = por %p126, %p127
    %p130 = scmp.ne.s32.totalorder %s113, %s129
    %p131 = scmp.eq.s32.totalorder %s23, 0
    %p132 = por %p130, %p131
    %s133 = ssub.s32 %s24, %s36
    %s134 = ssub.s32 %s25, %s32
    %s135 = sor.u32 %s133, %s134
    %p136 = scmp.eq.s32.totalorder %s135, 0
    %s138 = sadd.s32 %s137, 1
    %s139 = scalar_select %p136, %s137, %s138
    %p142 = pneg %p136
    %p143 = scmp.eq.s32.totalorder %s17, 1
    %p144 = por %p142, %p143
    %p145 = scmp.ne.s32.totalorder %s137, %s140
    %p146 = scmp.eq.s32.totalorder %s17, 0
    %p147 = por %p145, %p146
    %p148 = scmp.ne.s32.totalorder %s137, %s140
    %p149 = scmp.eq.s32.totalorder %s22, 1
    %p150 = por %p148, %p149
    %p151 = scmp.ne.s32.totalorder %s140, %s141
    %p152 = scmp.eq.s32.totalorder %s22, 0
    %p153 = por %p151, %p152
    %p154 = scmp.ne.s32.totalorder %s140, %s141
    %p155 = scmp.eq.s32.totalorder %s23, 1
    %p156 = por %p154, %p155
    %p158 = scmp.ne.s32.totalorder %s141, %s157
    %p159 = scmp.eq.s32.totalorder %s23, 0
    %p160 = por %p158, %p159
    %p161 = scmp.le.s32.totalorder 1, %s17
    %p162 = scmp.lt.s32.totalorder %s17, 3
    %p163 = pnand %p161, %p162
    %p164 = pneg %p163
    // Predicated region
    $region9: #{tpu_custom_call.1} parent=5 // pred_check
      _
    $region10: #{tpu_custom_call.1} parent=5 // pred_check_branch
      %166 = sbr.rel (%p163) target = $region12
    $region11: #{tpu_custom_call.1} parent=5 // pred_region
      %s167 = ssub.s32 %s17, 1
      // Predicated region
      $region13: #{tpu_custom_call.1} parent=11 // pred_check
        %p168 = pneg %p76
      $region14: #{tpu_custom_call.1} parent=11 // pred_check_branch
        %170 = sbr.rel (%p168) target = $region16
      $region15: #{tpu_custom_call.1} parent=11 // pred_region
        _
      $region16: #{tpu_custom_call.1} parent=11 // pred_fallthru
        _
      // Predicated region
      $region17: #{tpu_custom_call.1} parent=11 // pred_check
        %p171 = pneg %p97
      $region18: #{tpu_custom_call.1} parent=11 // pred_check_branch
        %173 = sbr.rel (%p171) target = $region20
      $region19: #{tpu_custom_call.1} parent=11 // pred_region
        _
      $region20: #{tpu_custom_call.1} parent=11 // pred_fallthru
        _
    $region12: #{tpu_custom_call.1} parent=5 // pred_fallthru
      _
    %p174 = scmp.lt.s32.totalorder %s17, 2
    // Predicated region
    $region21: #{tpu_custom_call.1} parent=5 // pred_check
      %p175 = pneg %p174
    $region22: #{tpu_custom_call.1} parent=5 // pred_check_branch
      %177 = sbr.rel (%p175) target = $region24
    $region23: #{tpu_custom_call.1} parent=5 // pred_region
      // Predicated region
      $region25: #{tpu_custom_call.1} parent=23 // pred_check
        %p178 = pneg %p49
      $region26: #{tpu_custom_call.1} parent=23 // pred_check_branch
        %180 = sbr.rel (%p178) target = $region28
      $region27: #{tpu_custom_call.1} parent=23 // pred_region
        %p181 = scmp.lt.s32.totalorder %s24, 1
        %s182 = scalar_select %p181, %s24, 1
        %s183 = smul.addr %s182, 4
        %s184 = scalar_lea.vmem %s1, %s183
      $region28: #{tpu_custom_call.1} parent=23 // pred_fallthru
        _
      // Predicated region
      $region29: #{tpu_custom_call.1} parent=23 // pred_check
        %p185 = pneg %p119
      $region30: #{tpu_custom_call.1} parent=23 // pred_check_branch
        %187 = sbr.rel (%p185) target = $region32
      $region31: #{tpu_custom_call.1} parent=23 // pred_region
        %p188 = scmp.lt.s32.totalorder %s24, 1
        %s189 = scalar_select %p188, %s24, 1
        %p190 = scmp.lt.s32.totalorder %s25, 0
        %s191 = scalar_select %p190, %s25, 0
        %s192 = sadd.s32 %s191, %s189
        %s193 = scalar_lea.vmem %s4, %s192
      $region32: #{tpu_custom_call.1} parent=23 // pred_fallthru
        _
    $region24: #{tpu_custom_call.1} parent=5 // pred_fallthru
      _
    %p194 = scmp.le.s32.totalorder 1, %s17
    %p195 = scmp.lt.s32.totalorder %s17, 3
    %p196 = pnand %p194, %p195
    %p197 = pneg %p196
    // Predicated region
    $region33: #{tpu_custom_call.1} parent=5 // pred_check
      _
    $region34: #{tpu_custom_call.1} parent=5 // pred_check_branch
      %199 = sbr.rel (%p196) target = $region36
    $region35: #{tpu_custom_call.1} parent=5 // pred_region
      %s200 = ssub.s32 %s17, 1
      %p201 = scmp.lt.s32.totalorder %s26, 1
      %s202 = scalar_select %p201, %s26, 1
      %s203 = smul.addr %s202, 4
      %s204 = scalar_lea.vmem %s1, %s203
      %p205 = pneg %p55
      %p206 = pneg %p52
      %p207 = pneg %p76
      %p208 = pneg %p73
      %p209 = pneg %p97
      %p210 = pneg %p94
      %p211 = scmp.lt.s32.totalorder %s26, 1
      %s212 = scalar_select %p211, %s26, 1
      %p213 = scmp.lt.s32.totalorder %s27, 0
      %s214 = scalar_select %p213, %s27, 0
      %s215 = sadd.s32 %s214, %s212
      %s216 = scalar_lea.vmem %s4, %s215
      %p217 = pneg %p125
      %p218 = pneg %p122
      %p219 = pneg %p153
      %p220 = pneg %p150
      %p221 = scmp.lt.s32.totalorder %s26, 1
      %s222 = scalar_select %p221, %s26, 1
      %p223 = scmp.lt.s32.totalorder %s27, 0
      %s224 = scalar_select %p223, %s27, 0
      %s225 = sadd.s32 %s224, %s222
      %s226 = smul.addr %s225, 8
      %s227 = scalar_lea.vmem %s5, %s226
      %p228 = scmp.lt.s32.totalorder %s26, 1
      %s229 = scalar_select %p228, %s26, 1
      %s230 = smul.addr %s229, 4
      %s231 = scalar_lea.vmem %s1, %s230
      %p232 = scmp.lt.s32.totalorder %s26, 1
      %s233 = scalar_select %p232, %s26, 1
      %p234 = scmp.lt.s32.totalorder %s27, 0
      %s235 = scalar_select %p234, %s27, 0
      %s236 = sadd.s32 %s235, %s233
      %s237 = scalar_lea.vmem %s4, %s236
      %p238 = scmp.lt.s32.totalorder %s26, 1
      %s239 = scalar_select %p238, %s26, 1
      %p240 = scmp.lt.s32.totalorder %s27, 0
      %s241 = scalar_select %p240, %s27, 0
      %s242 = sadd.s32 %s241, %s239
      %s243 = smul.addr %s242, 8
      %s244 = scalar_lea.vmem %s5, %s243
      %s245 = sadd.s32 %s26, %s27
      %s246 = sld [smem:[#allocation3 + %s245]]
      %p247 = scmp.ne.s32.totalorder %s246, 0
      // Predicated region
      $region37: #{tpu_custom_call.1} parent=35 // pred_check
        %p248 = pneg %p247
      $region38: #{tpu_custom_call.1} parent=35 // pred_check_branch
        %250 = sbr.rel (%p248) target = $region40
      $region39: #{tpu_custom_call.1} parent=35 // pred_region
        %v251 = vld [vmem:[%s231] sm:$0xf]
        %v252 = vld [vmem:[%s2] sm:$0x3f]
        %s253 = scalar_lea.vmem %s2, 8
        %v254 = vld [vmem:[%s253] sm:$0x3f]
        %256 = vrot.lane.b32.xlu0 %v251, 127
        %v257 = vpop.permute.xlu0 %256
        %vm258 = vcmask 31744
        %v260 = vsel %vm258, %v254, 0
        %vm262 = vcmask 1043456
        %v263 = vsel %vm262, %v257, 0
        %265 = vmatprep.subr.mxu0 0.0
        %266 = vmatpush1.msra.mxu0 %v263
        %267 = vmatprep.subr.mxu0 0.0
        %268 = vmatpush1.msra.mxu0 0.0
        %269 = vmatprep.subr.mxu0 0.0
        %270 = vmatpush1.msra.mxu0 0.0
        %271 = vmatprep.subr.mxu0 0.0
        %272 = vmatpush1.msra.mxu0 0.0
        %273 = vmatprep.subr.mxu0 0.0
        %274 = vmatpush1.msra.mxu0 0.0
        %275 = vmatprep.subr.mxu0 0.0
        %276 = vmatpush1.msra.mxu0 0.0
        %277 = vmatprep.subr.mxu0 0.0
        %278 = vmatpush1.msra.mxu0 0.0
        %279 = vmatprep.subr.mxu0 0.0
        %280 = vmatpush1.msra.mxu0 0.0
        %281 = vmatprep.subr.mxu0 0.0
        %282 = vmatpush1.msra.mxu0 0.0
        %283 = vmatprep.subr.mxu0 0.0
        %284 = vmatpush1.msra.mxu0 0.0
        %285 = vmatprep.subr.mxu0 0.0
        %286 = vmatpush1.msra.mxu0 0.0
        %287 = vmatprep.subr.mxu0 0.0
        %288 = vmatpush1.msra.mxu0 0.0
        %289 = vmatprep.subr.mxu0 0.0
        %290 = vmatpush1.msra.mxu0 0.0
        %291 = vmatprep.subr.mxu0 0.0
        %292 = vmatpush1.msra.mxu0 0.0
        %293 = vmatprep.subr.mxu0 0.0
        %294 = vmatpush1.msra.mxu0 0.0
        %295 = vmatprep.subr.mxu0 0.0
        %296 = vmatpush1.msra.mxu0 0.0
        %297 = vmatprep.subr.mxu0 0.0
        %298 = vmatpush1.msra.mxu0 0.0
        %299 = vmatprep.subr.mxu0 0.0
        %300 = vmatpush1.msra.mxu0 0.0
        %301 = vmatprep.subr.mxu0 0.0
        %302 = vmatpush1.msra.mxu0 0.0
        %303 = vmatprep.subr.mxu0 0.0
        %304 = vmatpush1.msra.mxu0 0.0
        %305 = vmatprep.subr.mxu0 0.0
        %306 = vmatpush1.msra.mxu0 0.0
        %307 = vmatprep.subr.mxu0 0.0
        %308 = vmatpush1.msra.mxu0 0.0
        %309 = vmatprep.subr.mxu0 0.0
        %310 = vmatpush1.msra.mxu0 0.0
        %311 = vmatprep.subr.mxu0 0.0
        %312 = vmatpush1.msra.mxu0 0.0
        %313 = vmatprep.subr.mxu0 0.0
        %314 = vmatpush1.msra.mxu0 0.0
        %315 = vmatprep.subr.mxu0 0.0
        %316 = vmatpush1.msra.mxu0 0.0
        %317 = vmatprep.subr.mxu0 0.0
        %318 = vmatpush1.msra.mxu0 0.0
        %319 = vmatprep.subr.mxu0 0.0
        %320 = vmatpush1.msra.mxu0 0.0
        %321 = vmatprep.subr.mxu0 0.0
        %322 = vmatpush1.msra.mxu0 0.0
        %323 = vmatprep.subr.mxu0 0.0
        %324 = vmatpush1.msra.mxu0 0.0
        %325 = vmatprep.subr.mxu0 0.0
        %326 = vmatpush1.msra.mxu0 0.0
        %327 = vmatprep.subr.mxu0 0.0
        %328 = vmatpush1.msra.mxu0 0.0
        %329 = vmatprep.mubr.f32.mxu0 0.0
        %330 = vmatmul.mubr.f32.gmra.mrb[0].mxu0 %v260
        %v331 = vpop.f32.mrb[0].mxu0
        %v332 = vadd.f32 0.0, %v331
        %v333 = vpop.f32.mrb[0].mxu0
        %334 = vdwg.mxu0
        %v336 = vsel %vm258, %v252, 0
        %v338 = vsel %vm262, %v251, 0
        %340 = vmatprep.subr.mxu0 0.0
        %341 = vmatpush1.msra.mxu0 %v338
        %342 = vmatprep.subr.mxu0 0.0
        %343 = vmatpush1.msra.mxu0 0.0
        %344 = vmatprep.subr.mxu0 0.0
        %345 = vmatpush1.msra.mxu0 0.0
        %346 = vmatprep.subr.mxu0 0.0
        %347 = vmatpush1.msra.mxu0 0.0
        %348 = vmatprep.subr.mxu0 0.0
        %349 = vmatpush1.msra.mxu0 0.0
        %350 = vmatprep.subr.mxu0 0.0
        %351 = vmatpush1.msra.mxu0 0.0
        %352 = vmatprep.subr.mxu0 0.0
        %353 = vmatpush1.msra.mxu0 0.0
        %354 = vmatprep.subr.mxu0 0.0
        %355 = vmatpush1.msra.mxu0 0.0
        %356 = vmatprep.subr.mxu0 0.0
        %357 = vmatpush1.msra.mxu0 0.0
        %358 = vmatprep.subr.mxu0 0.0
        %359 = vmatpush1.msra.mxu0 0.0
        %360 = vmatprep.subr.mxu0 0.0
        %361 = vmatpush1.msra.mxu0 0.0
        %362 = vmatprep.subr.mxu0 0.0
        %363 = vmatpush1.msra.mxu0 0.0
        %364 = vmatprep.subr.mxu0 0.0
        %365 = vmatpush1.msra.mxu0 0.0
        %366 = vmatprep.subr.mxu0 0.0
        %367 = vmatpush1.msra.mxu0 0.0
        %368 = vmatprep.subr.mxu0 0.0
        %369 = vmatpush1.msra.mxu0 0.0
        %370 = vmatprep.subr.mxu0 0.0
        %371 = vmatpush1.msra.mxu0 0.0
        %372 = vmatprep.subr.mxu0 0.0
        %373 = vmatpush1.msra.mxu0 0.0
        %374 = vmatprep.subr.mxu0 0.0
        %375 = vmatpush1.msra.mxu0 0.0
        %376 = vmatprep.subr.mxu0 0.0
        %377 = vmatpush1.msra.mxu0 0.0
        %378 = vmatprep.subr.mxu0 0.0
        %379 = vmatpush1.msra.mxu0 0.0
        %380 = vmatprep.subr.mxu0 0.0
        %381 = vmatpush1.msra.mxu0 0.0
        %382 = vmatprep.subr.mxu0 0.0
        %383 = vmatpush1.msra.mxu0 0.0
        %384 = vmatprep.subr.mxu0 0.0
        %385 = vmatpush1.msra.mxu0 0.0
        %386 = vmatprep.subr.mxu0 0.0
        %387 = vmatpush1.msra.mxu0 0.0
        %388 = vmatprep.subr.mxu0 0.0
        %389 = vmatpush1.msra.mxu0 0.0
        %390 = vmatprep.subr.mxu0 0.0
        %391 = vmatpush1.msra.mxu0 0.0
        %392 = vmatprep.subr.mxu0 0.0
        %393 = vmatpush1.msra.mxu0 0.0
        %394 = vmatprep.subr.mxu0 0.0
        %395 = vmatpush1.msra.mxu0 0.0
        %396 = vmatprep.subr.mxu0 0.0
        %397 = vmatpush1.msra.mxu0 0.0
        %398 = vmatprep.subr.mxu0 0.0
        %399 = vmatpush1.msra.mxu0 0.0
        %400 = vmatprep.subr.mxu0 0.0
        %401 = vmatpush1.msra.mxu0 0.0
        %402 = vmatprep.subr.mxu0 0.0
        %403 = vmatpush1.msra.mxu0 0.0
        %404 = vmatprep.mubr.f32.mxu0 0.0
        %405 = vmatmul.mubr.f32.gmra.mrb[0].mxu0 %v336
        %v406 = vpop.f32.mrb[0].mxu0
        %v407 = vadd.f32 %v332, %v406
        %v408 = vpop.f32.mrb[0].mxu0
        %409 = vdwg.mxu0
        %s410 = scalar_lea.vmem %s2, 16
        %v411 = vld [vmem:[%s410] sm:$0x3f]
        %412 = vrot.lane.b32.xlu0 %v251, 126
        %v413 = vpop.permute.xlu0 %412
        %v415 = vsel %vm258, %v411, 0
        %v417 = vsel %vm262, %v413, 0
        %419 = vmatprep.subr.mxu0 0.0
        %420 = vmatpush1.msra.mxu0 %v417
        %421 = vmatprep.subr.mxu0 0.0
        %422 = vmatpush1.msra.mxu0 0.0
        %423 = vmatprep.subr.mxu0 0.0
        %424 = vmatpush1.msra.mxu0 0.0
        %425 = vmatprep.subr.mxu0 0.0
        %426 = vmatpush1.msra.mxu0 0.0
        %427 = vmatprep.subr.mxu0 0.0
        %428 = vmatpush1.msra.mxu0 0.0
        %429 = vmatprep.subr.mxu0 0.0
        %430 = vmatpush1.msra.mxu0 0.0
        %431 = vmatprep.subr.mxu0 0.0
        %432 = vmatpush1.msra.mxu0 0.0
        %433 = vmatprep.subr.mxu0 0.0
        %434 = vmatpush1.msra.mxu0 0.0
        %435 = vmatprep.subr.mxu0 0.0
        %436 = vmatpush1.msra.mxu0 0.0
        %437 = vmatprep.subr.mxu0 0.0
        %438 = vmatpush1.msra.mxu0 0.0
        %439 = vmatprep.subr.mxu0 0.0
        %440 = vmatpush1.msra.mxu0 0.0
        %441 = vmatprep.subr.mxu0 0.0
        %442 = vmatpush1.msra.mxu0 0.0
        %443 = vmatprep.subr.mxu0 0.0
        %444 = vmatpush1.msra.mxu0 0.0
        %445 = vmatprep.subr.mxu0 0.0
        %446 = vmatpush1.msra.mxu0 0.0
        %447 = vmatprep.subr.mxu0 0.0
        %448 = vmatpush1.msra.mxu0 0.0
        %449 = vmatprep.subr.mxu0 0.0
        %450 = vmatpush1.msra.mxu0 0.0
        %451 = vmatprep.subr.mxu0 0.0
        %452 = vmatpush1.msra.mxu0 0.0
        %453 = vmatprep.subr.mxu0 0.0
        %454 = vmatpush1.msra.mxu0 0.0
        %455 = vmatprep.subr.mxu0 0.0
        %456 = vmatpush1.msra.mxu0 0.0
        %457 = vmatprep.subr.mxu0 0.0
        %458 = vmatpush1.msra.mxu0 0.0
        %459 = vmatprep.subr.mxu0 0.0
        %460 = vmatpush1.msra.mxu0 0.0
        %461 = vmatprep.subr.mxu0 0.0
        %462 = vmatpush1.msra.mxu0 0.0
        %463 = vmatprep.subr.mxu0 0.0
        %464 = vmatpush1.msra.mxu0 0.0
        %465 = vmatprep.subr.mxu0 0.0
        %466 = vmatpush1.msra.mxu0 0.0
        %467 = vmatprep.subr.mxu0 0.0
        %468 = vmatpush1.msra.mxu0 0.0
        %469 = vmatprep.subr.mxu0 0.0
        %470 = vmatpush1.msra.mxu0 0.0
        %471 = vmatprep.subr.mxu0 0.0
        %472 = vmatpush1.msra.mxu0 0.0
        %473 = vmatprep.subr.mxu0 0.0
        %474 = vmatpush1.msra.mxu0 0.0
        %475 = vmatprep.subr.mxu0 0.0
        %476 = vmatpush1.msra.mxu0 0.0
        %477 = vmatprep.subr.mxu0 0.0
        %478 = vmatpush1.msra.mxu0 0.0
        %479 = vmatprep.subr.mxu0 0.0
        %480 = vmatpush1.msra.mxu0 0.0
        %481 = vmatprep.subr.mxu0 0.0
        %482 = vmatpush1.msra.mxu0 0.0
        %483 = vmatprep.mubr.f32.mxu0 0.0
        %484 = vmatmul.mubr.f32.gmra.mrb[0].mxu0 %v415
        %v485 = vpop.f32.mrb[0].mxu0
        %v486 = vadd.f32 0.0, %v485
        %v487 = vpop.f32.mrb[0].mxu0
        %488 = vdwg.mxu0
        %v489 = vadd.f32 %v407, %v486
        %v490 = vld [vmem:[%s3] sm:$0x3f]
        %492 = vset.pattern.permute.xlu0 0
        %493 = vperm.xlu0 %492, %v490
        %v494 = vpop.permute.xlu0 %493
        %v496 = vadd.f32 %v489, %v494
        %v497 = vld [vmem:[%s237] sm:$0x1]
        %v499 = vlaneseq
        %v500 = vshrl.u32 %v499, 7
        %v501 = vsub.s32 0, %v500
        %v502 = vrot.slane %v497, %v501
        %v504 = vmul.f32 %v496, %v502
        %vm505 = vcmask 128000
        %506 = vst.msk [vmem:[%s244] sm:$0x3f] %vm505, %v504
      $region40: #{tpu_custom_call.1} parent=35 // pred_fallthru
        _
      %p507 = scmp.eq.s32.totalorder %s246, 0
      // Predicated region
      $region41: #{tpu_custom_call.1} parent=35 // pred_check
        %p508 = pneg %p507
      $region42: #{tpu_custom_call.1} parent=35 // pred_check_branch
        %510 = sbr.rel (%p508) target = $region44
      $region43: #{tpu_custom_call.1} parent=35 // pred_region
        %vm511 = vcmask 128000
        %512 = vst.msk [vmem:[%s244] sm:$0x3f] %vm511, 0.0
      $region44: #{tpu_custom_call.1} parent=35 // pred_fallthru
        _
      %p513 = scmp.lt.s32.totalorder %s26, 1
      %s514 = scalar_select %p513, %s26, 1
      %p515 = scmp.lt.s32.totalorder %s27, 0
      %s516 = scalar_select %p515, %s27, 0
      %s517 = sadd.s32 %s516, %s514
      %s518 = smul.addr %s517, 8
      %s519 = scalar_lea.vmem %s5, %s518
      // Predicated region
      $region45: #{tpu_custom_call.1} parent=35 // pred_check
        %p520 = pneg %p150
      $region46: #{tpu_custom_call.1} parent=35 // pred_check_branch
        %522 = sbr.rel (%p520) target = $region48
      $region47: #{tpu_custom_call.1} parent=35 // pred_region
        _
      $region48: #{tpu_custom_call.1} parent=35 // pred_fallthru
        _
    $region36: #{tpu_custom_call.1} parent=5 // pred_fallthru
      _
    %p523 = scmp.le.s32.totalorder 2, %s17
    // Predicated region
    $region49: #{tpu_custom_call.1} parent=5 // pred_check
      %p524 = pneg %p523
    $region50: #{tpu_custom_call.1} parent=5 // pred_check_branch
      %526 = sbr.rel (%p524) target = $region52
    $region51: #{tpu_custom_call.1} parent=5 // pred_region
      %s527 = ssub.s32 %s17, 2
      // Predicated region
      $region53: #{tpu_custom_call.1} parent=51 // pred_check
        %p528 = pneg %p156
      $region54: #{tpu_custom_call.1} parent=51 // pred_check_branch
        %530 = sbr.rel (%p528) target = $region56
      $region55: #{tpu_custom_call.1} parent=51 // pred_region
        %p531 = scmp.lt.s32.totalorder %s28, 1
        %s532 = scalar_select %p531, %s28, 1
        %p533 = scmp.lt.s32.totalorder %s29, 0
        %s534 = scalar_select %p533, %s29, 0
        %s535 = sadd.s32 %s534, %s532
        %s536 = smul.addr %s535, 8
        %s537 = scalar_lea.vmem %s5, %s536
      $region56: #{tpu_custom_call.1} parent=51 // pred_fallthru
        _
    $region52: #{tpu_custom_call.1} parent=5 // pred_fallthru
      _
  $region6: #{tpu_custom_call.1} parent=0 // loop_footer
    %s21 = sadd.s32 1, %s17
  $region7: #{tpu_custom_call.1} parent=0 // loop_footer_branch
    %16 = sbr.rel target = $region3
  $region8: #{tpu_custom_call.1} parent=0 // loop_exit
    _

</llo_original>
